<compile_context>
chip_gen: v5e
topology: v5e:2x2
jax: 0.10.0
libtpu: 0.0.40
codegen_flags: <defaults>
</compile_context>

<pallas_src>
import jax
import jax.numpy as jnp
from jax.experimental import pallas as pl
from jax.experimental.pallas import tpu as pltpu

IN_FEATURES = 40
OUT_FEATURES = 30
DEFAULT_BLOCK_B = 8192   # rows per batch tile; x + out buffers (lane-padded
                         # to 128 in VMEM), double-buffered ~= 16 MiB.


def _round_up(n, m):
    return (n + m - 1) // m * m


def nest_mlp_kernel(x_ref, w_ref, b_ref, o_ref):
    # x (tb, 40) @ w (40, 30) on the MXU with f32 accumulation,
    # then bias add + ReLU on the VPU; store the 30-wide tile directly.
    acc = jnp.dot(x_ref[...], w_ref[...], preferred_element_type=jnp.float32)
    acc = acc + b_ref[...]                       # broadcast (1, 30) over rows
    o_ref[...] = jnp.maximum(acc, 0.0).astype(o_ref.dtype)


def nest_mlp_forward(x, w, b, *, block_b=DEFAULT_BLOCK_B):
    """x: (B, 40) f32, w: (40, 30) f32, b: (30,) f32 -> (B, 30) f32."""
    B = x.shape[0]
    b2 = b.reshape(1, OUT_FEATURES)

    # Batch tile: multiple of 8 sublanes, capped at ~half the batch so large
    # batches always give >=2 grid steps (v7x megacore), never above block_b.
    half = _round_up(pl.cdiv(B, 2), 8)
    tb = max(8, min(block_b, half))
    grid = (pl.cdiv(B, tb),)   # ragged last block handled by Pallas

    flops = 2 * B * IN_FEATURES * OUT_FEATURES
    bytes_accessed = (B * IN_FEATURES * 4 + B * OUT_FEATURES * 4
                      + IN_FEATURES * OUT_FEATURES * 4 + OUT_FEATURES * 4)

    return pl.pallas_call(
        nest_mlp_kernel,
        out_shape=jax.ShapeDtypeStruct((B, OUT_FEATURES), x.dtype),
        grid_spec=pl.GridSpec(
            grid=grid,
            in_specs=[
                # x: one batch tile per grid step (pipelined HBM->VMEM).
                pl.BlockSpec((tb, IN_FEATURES), lambda i: (i, 0)),
                # w, b: constant index_map -> stay resident in VMEM.
                pl.BlockSpec((IN_FEATURES, OUT_FEATURES), lambda i: (0, 0)),
                pl.BlockSpec((1, OUT_FEATURES), lambda i: (0, 0)),
            ],
            out_specs=pl.BlockSpec((tb, OUT_FEATURES), lambda i: (i, 0)),
        ),
        compiler_params=pltpu.CompilerParams(
            # Independent batch tiles -> megacore sharding on v7x.
            dimension_semantics=("parallel",),
            vmem_limit_bytes=32 * 1024 * 1024,
        ),
        cost_estimate=pl.CostEstimate(
            flops=flops, bytes_accessed=bytes_accessed, transcendentals=0),
    )(x, w, b2)


def init_params(key):
    """Deterministic init matching nn.Linear(40, 30) default:
    U(-1/sqrt(in), 1/sqrt(in)) for both weight and bias."""
    kw, kb = jax.random.split(key)
    bound = 1.0 / jnp.sqrt(jnp.float32(IN_FEATURES))
    # PyTorch stores weight as (out, in); we keep the transposed (in, out)
    # layout so the kernel computes x @ W directly (same math as x @ W_pt.T).
    w = jax.random.uniform(kw, (IN_FEATURES, OUT_FEATURES), jnp.float32,
                           minval=-bound, maxval=bound)
    b = jax.random.uniform(kb, (OUT_FEATURES,), jnp.float32,
                           minval=-bound, maxval=bound)
    return w, b


# TODO(synk): if this layer lives inside a larger model, fuse it with the
# adjacent layers into one pallas_call so the 30-wide activation never makes
# a separate HBM round-trip.

if __name__ == "__main__":
    key = jax.random.PRNGKey(0)
    kx, kx2, kp = jax.random.split(key, 3)

    w, b = init_params(kp)

    # Small, tile-aligned batch.
    B = 8
    x = jax.random.normal(kx, (B, IN_FEATURES), jnp.float32)
    y = nest_mlp_forward(x, w, b)
    jax.block_until_ready(y)
    y_ref = jnp.maximum(x @ w + b, 0.0)
    assert y.shape == (B, OUT_FEATURES)
    assert jnp.allclose(y, y_ref, atol=1e-5, rtol=1e-5)

    # Non-multiple-of-tile batch exercises the ragged last grid block.
    B2 = 37
    x2 = jax.random.normal(kx2, (B2, IN_FEATURES), jnp.float32)
    y2 = nest_mlp_forward(x2, w, b)
    jax.block_until_ready(y2)
    y2_ref = jnp.maximum(x2 @ w + b, 0.0)
    assert y2.shape == (B2, OUT_FEATURES)
    assert jnp.allclose(y2, y2_ref, atol=1e-5, rtol=1e-5)

    print("KERNEL_OK")
</pallas_src>

<mosaic_0001>
module attributes {stable_mosaic.version = 11 : i64} {
  func.func @nest_mlp_kernel(%arg0: i32, %arg1: memref<8x40xf32, #tpu.memory_space<vmem>>, %arg2: memref<40x30xf32, #tpu.memory_space<vmem>>, %arg3: memref<1x30xf32, #tpu.memory_space<vmem>>, %arg4: memref<8x30xf32, #tpu.memory_space<vmem>>) attributes {dimension_semantics = [#tpu.dimension_semantics<parallel>], iteration_bounds = array<i64: 1>, scalar_prefetch = 0 : i64, scratch_operands = 0 : i64, tpu.core_type = #tpu.core_type<tc>, window_params = [{transform_indices = @transform_0, window_bounds = array<i64: 8, 40>}, {pipeline_mode = #tpu.pipeline_mode<synchronous>, transform_indices = @transform_1, window_bounds = array<i64: 40, 30>}, {pipeline_mode = #tpu.pipeline_mode<synchronous>, transform_indices = @transform_2, window_bounds = array<i64: 1, 30>}, {transform_indices = @transform_3, window_bounds = array<i64: 8, 30>}]} {
    %c0 = arith.constant 0 : index
    %c0_0 = arith.constant 0 : index
    %0 = vector.load %arg1[%c0, %c0_0] : memref<8x40xf32, #tpu.memory_space<vmem>>, vector<8x40xf32>
    %c0_1 = arith.constant 0 : index
    %c0_2 = arith.constant 0 : index
    %1 = vector.load %arg2[%c0_1, %c0_2] : memref<40x30xf32, #tpu.memory_space<vmem>>, vector<40x30xf32>
    %cst = arith.constant dense<0.000000e+00> : vector<8x30xf32>
    %2 = tpu.matmul %0, %1, %cst {dimension_numbers = #tpu.dot_dimension_numbers<[1], [0], [0], [1], [0, 0, 1, 1], [], []>} : vector<8x40xf32>, vector<40x30xf32>, vector<8x30xf32> -> vector<8x30xf32>
    %c0_3 = arith.constant 0 : index
    %c0_4 = arith.constant 0 : index
    %3 = vector.load %arg3[%c0_3, %c0_4] : memref<1x30xf32, #tpu.memory_space<vmem>>, vector<1x30xf32>
    %4 = vector.broadcast %3 : vector<1x30xf32> to vector<8x30xf32>
    %5 = arith.addf %2, %4 : vector<8x30xf32>
    %cst_5 = arith.constant 0.000000e+00 : f32
    %6 = vector.broadcast %cst_5 : f32 to vector<8x30xf32>
    %7 = arith.maximumf %5, %6 : vector<8x30xf32>
    %c0_6 = arith.constant 0 : index
    %c0_7 = arith.constant 0 : index
    %8 = vector.load %arg4[%c0_6, %c0_7] : memref<8x30xf32, #tpu.memory_space<vmem>>, vector<8x30xf32>
    tpu.vector_store %arg4[%c0_6, %c0_7], %7 {strides = array<i32>} : memref<8x30xf32, #tpu.memory_space<vmem>>, vector<8x30xf32>,
    return
  }
  func.func @transform_0(%arg0: i32) -> (i32, i32) {
    %c0_i32 = arith.constant 0 : i32
    %c0_i32_0 = arith.constant 0 : i32
    return %arg0, %c0_i32 : i32, i32
  }
  func.func @transform_1(%arg0: i32) -> (i32, i32) {
    %c0_i32 = arith.constant 0 : i32
    %c0_i32_0 = arith.constant 0 : i32
    %c0_i32_1 = arith.constant 0 : i32
    return %c0_i32, %c0_i32_0 : i32, i32
  }
  func.func @transform_2(%arg0: i32) -> (i32, i32) {
    %c0_i32 = arith.constant 0 : i32
    %c0_i32_0 = arith.constant 0 : i32
    %c0_i32_1 = arith.constant 0 : i32
    return %c0_i32, %c0_i32_0 : i32, i32
  }
  func.func @transform_3(%arg0: i32) -> (i32, i32) {
    %c0_i32 = arith.constant 0 : i32
    %c0_i32_0 = arith.constant 0 : i32
    return %arg0, %c0_i32 : i32, i32
  }
}

</mosaic_0001>

<llo_original>
// kernel: tpu_custom_call.1
$region0: #{tpu_custom_call.1}
  #allocation0 [shape = 'u32[]', space=smem, size = 0x4, offset = 0x4, fixed_abs, tag = 'smem constant byte address 0x4 - core index']
  #allocation1 [shape = 'u32[72,128]{1,0:T(1,128)}', space=vmem, size = 0x9000, scoped, tag = 'internal scratch']
  %s0 = inlined_call_operand.vmem [shape: f32[8,40], index: 0, kind: input, shape index: {}]
  %s1 = inlined_call_operand.vmem [shape: f32[40,30], index: 1, kind: input, shape index: {}]
  %s2 = inlined_call_operand.vmem [shape: f32[1,30], index: 2, kind: input, shape index: {}]
  %s3 = inlined_call_operand.hbm [shape: f32[8,30], index: 3, kind: output, shape index: {}]
  %s4 = sld [smem:[#allocation0]]
  $region22: #{tpu_custom_call.1} parent=0
    _
  %s6 = ssub.s32 1, %s4
  %s7 = scalar_select 0, %s6, %s4
  $region1: #{tpu_custom_call.1} parent=0
    #allocation2 [shape = 'u8[4096]{0}', space=vmem, size = 0x1000, scoped, tag = 'output window, operand 0, single buffered']
    #allocation3 [shape = 's32[1]{0}', space=sflag, size = 0x4, scoped, tag = 'scoped memory for tpu_custom_call.1']
    %8 = vsyncpa [#allocation3], 0
    // Predicated region
    $region2: #{tpu_custom_call.1} parent=1 // pred_check
      _
    $region3: #{tpu_custom_call.1} parent=1 // pred_check_branch
      %10 = sbr.rel (0) target = $region5
    $region4: #{tpu_custom_call.1} parent=1 // pred_region
      _
    $region5: #{tpu_custom_call.1} parent=1 // pred_fallthru
      _
    // Predicated region
    $region6: #{tpu_custom_call.1} parent=1 // pred_check
      _
    $region7: #{tpu_custom_call.1} parent=1 // pred_check_branch
      %12 = sbr.rel (0) target = $region9
    $region8: #{tpu_custom_call.1} parent=1 // pred_region
      _
    $region9: #{tpu_custom_call.1} parent=1 // pred_fallthru
      _
    // Predicated region
    $region10: #{tpu_custom_call.1} parent=1 // pred_check
      _
    $region11: #{tpu_custom_call.1} parent=1 // pred_check_branch
      %14 = sbr.rel (0) target = $region13
    $region12: #{tpu_custom_call.1} parent=1 // pred_region
      _
    $region13: #{tpu_custom_call.1} parent=1 // pred_fallthru
      _
    %v15 = vld [vmem:[%s0] sm:$0xff]
    %v16 = vld [vmem:[%s1] sm:$0xff]
    %v17 = vld [vmem:[%s1 + $0x8] sm:$0xff]
    %v18 = vld [vmem:[%s1 + $0x10] sm:$0xff]
    %v19 = vld [vmem:[%s1 + $0x18] sm:$0xff]
    %v20 = vld [vmem:[%s1 + $0x20] sm:$0xff]
    %v21 = vld [vmem:[%s2] sm:$0x1]
    %v23 = vperm.slane %v21, 0
    %vm25 = vcmask 326656
    %v27 = vsel %vm25, %v15, 0
    %29 = vmatpush.msra.mxu0 0.0
    %30 = vmatpush.msra.mxu0 0.0
    %31 = vmatpush.msra.mxu0 0.0
    %32 = vmatpush.msra.mxu0 0.0
    %33 = vmatpush.msra.mxu0 0.0
    %34 = vmatpush.msra.mxu0 0.0
    %35 = vmatpush.msra.mxu0 0.0
    %36 = vmatpush.msra.mxu0 0.0
    %37 = vmatpush.msra.mxu0 0.0
    %38 = vmatpush.msra.mxu0 0.0
    %39 = vmatpush.msra.mxu0 0.0
    %40 = vmatpush.msra.mxu0 %v20
    %41 = vmatpush.msra.mxu0 %v19
    %42 = vmatpush.msra.mxu0 %v18
    %43 = vmatpush.msra.mxu0 %v17
    %44 = vmatpush.msra.mxu0 %v16
    %45 = vmatmul.f32.gmra.mxu0 %v27
    %v46 = vpop.f32.mrf.mxu0
    %v47 = vadd.f32 %v23, %v46
    %48 = vdwg.mxu0
    %v49 = vmax.f32 %v47, 0.0
    %vm50 = vcmask 244736
    %51 = vst.msk [vmem:[#allocation2] sm:$0xff] %vm50, %v49
    // Predicated region
    $region14: #{tpu_custom_call.1} parent=1 // pred_check
      _
    $region15: #{tpu_custom_call.1} parent=1 // pred_check_branch
      %53 = sbr.rel (0) target = $region17
    $region16: #{tpu_custom_call.1} parent=1 // pred_region
      %55 = vsyncadd [#allocation3], 0
      %s57 = sshll.u32 [#allocation2], 4
      %s58 = int_to_ptr.vmem [resolvable:$true] %s57
      %s59 = sshll.u32 %s3, 4
      %s60 = int_to_ptr.hbm [resolvable:$true] %s59
      %62 = dma.vmem_to_hbm [thread:$0]  %s58, 128, %s60, [#allocation3]
    $region17: #{tpu_custom_call.1} parent=1 // pred_fallthru
      _
    // Predicated region
    $region18: #{tpu_custom_call.1} parent=1 // pred_check
      _
    $region19: #{tpu_custom_call.1} parent=1 // pred_check_branch
      %64 = sbr.rel (0) target = $region21
    $region20: #{tpu_custom_call.1} parent=1 // pred_region
      %66 = dma.done [#allocation3], 128
    $region21: #{tpu_custom_call.1} parent=1 // pred_fallthru
      _
    %67 = vsyncpa [#allocation3], 1

</llo_original>
